<compile_context>
chip_gen: v7x
topology: tpu7x:2x2x1
jax: 0.10.0
libtpu: 0.0.40
codegen_flags: <defaults>
</compile_context>

<pallas_src>
import functools
import math

import numpy as np
import jax
import jax.numpy as jnp
from jax.experimental import pallas as pl
from jax.experimental.pallas import tpu as pltpu

BPM_LO, BPM_HI = 45, 150            # matches torch.arange(45, 150)
N_BINS = BPM_HI - BPM_LO            # 105 bpm bins
PAD_BINS = 128                      # lane-aligned bin axis (per sin / cos half)
DFT_COLS = 2 * PAD_BINS             # [sin | 0-pad | cos | 0-pad]
SPEC_ROWS = 8                       # sublane-aligned LHS row count
TK_MAX = 4096                       # contraction-tile length (time samples)


# --------------------------------------------------------------------------
# Host-side (numpy) constant construction — baked into the executable
# --------------------------------------------------------------------------
@functools.lru_cache(maxsize=16)
def _make_windowed_dft_np(n_total, n_pad, fs):
    """(n_pad, 256) bf16 = [hann*sin | 0 | hann*cos | 0]; rows >= n_total are zero."""
    n = np.arange(n_total, dtype=np.float64)
    denom = max(n_total - 1, 1)
    hann = 0.5 - 0.5 * np.cos(2.0 * np.pi * n / denom)          # np.hanning(N)
    bpm = np.arange(BPM_LO, BPM_HI, dtype=np.float64)
    k = (bpm / 60.0) / (fs / n_total)                            # (105,)
    phase = (2.0 * np.pi / n_total) * n[:, None] * k[None, :]    # (N, 105)
    out = np.zeros((n_pad, DFT_COLS), np.float32)
    out[:n_total, :N_BINS] = np.sin(phase) * hann[:, None]
    out[:n_total, PAD_BINS:PAD_BINS + N_BINS] = np.cos(phase) * hann[:, None]
    return out.astype(jnp.bfloat16)   # host constant, bf16 halves the HBM stream


# --------------------------------------------------------------------------
# Fused kernel: tiled spectrum matmul + Pearson sums, finalize on last step
# --------------------------------------------------------------------------
def _fused_loss_kernel(n_total, std, xs_ref, dft_ref, pxy_ref, loss_ref,
                       acc_ref, pear_ref):
    k = pl.program_id(0)

    @pl.when(k == 0)
    def _init():
        acc_ref[...] = jnp.zeros_like(acc_ref)
        pear_ref[...] = jnp.zeros_like(pear_ref)

    # ---- spectrum accumulation: lane-dense (8,TK)@(TK,256) MXU, f32 acc ----
    acc_ref[...] += jnp.dot(xs_ref[...], dft_ref[...],
                            preferred_element_type=jnp.float32)

    # ---- Pearson partial sums (exact f32 side stream; zero padding cancels) ----
    x = pxy_ref[0:1, :]
    y = pxy_ref[1:2, :]
    pear_ref[0:1, :] += jnp.sum(x, axis=1, keepdims=True)
    pear_ref[1:2, :] += jnp.sum(y, axis=1, keepdims=True)
    pear_ref[2:3, :] += jnp.sum(x * y, axis=1, keepdims=True)
    pear_ref[3:4, :] += jnp.sum(x * x, axis=1, keepdims=True)
    pear_ref[4:5, :] += jnp.sum(y * y, axis=1, keepdims=True)

    # ---- finalize: argmax / CE / KL / Pearson, scalar loss ----
    @pl.when(k == pl.num_programs(0) - 1)
    def _finalize():
        proj = acc_ref[...]                               # (8, 256) f32
        s = proj[:, :PAD_BINS]
        c = proj[:, PAD_BINS:]
        spec = s * s + c * c                              # (8, 128); pad lanes/rows = 0

        bins = jax.lax.broadcasted_iota(jnp.int32, (1, PAD_BINS), 1)
        binsf = bins.astype(jnp.float32)
        valid = binsf < jnp.float32(N_BINS)               # (1, 128) real-bin mask

        ca_raw = spec[0:1, :]        # raw pred spectrum (CE logits source)
        psd_p = spec[1:2, :]         # processed pred spectrum
        psd_g = spec[2:3, :]         # processed label spectrum

        def lane_argmax(v):
            # first-occurrence argmax over the 105 valid bins, as float bin index
            vm = jnp.where(valid, v, -1.0)
            mx = jnp.max(vm, axis=-1, keepdims=True)
            return jnp.min(jnp.where(vm == mx, binsf, jnp.float32(PAD_BINS)),
                           axis=-1, keepdims=True)        # (1, 1)

        hr_gt_bin = lane_argmax(psd_g)
        hr_pred_bin = lane_argmax(psd_p)

        # ---- Frequency_loss: cross-entropy with normalized spectrum as logits ----
        ca = ca_raw / (jnp.sum(ca_raw, axis=-1, keepdims=True) + 1e-12)
        logits = jnp.where(valid, ca, -1e30)
        m = jnp.max(logits, axis=-1, keepdims=True)
        lse = m + jnp.log(jnp.sum(jnp.exp(logits - m), axis=-1, keepdims=True))
        ca_at_gt = jnp.sum(jnp.where(binsf == hr_gt_bin, ca, 0.0),
                           axis=-1, keepdims=True)
        loss_ce = lse - ca_at_gt
        # (loss_distribution_kl of Frequency_loss is unused by the module forward)

        # ---- HR_loss: KL between Gaussians centered at the two HR bins ----
        inv2s2 = jnp.float32(1.0 / (2.0 * std * std))
        norm_c = jnp.float32(1.0 / (math.sqrt(2.0 * math.pi) * std))

        def normal_dist(mean_bin):
            d = jnp.exp(-(binsf - mean_bin) * (binsf - mean_bin) * inv2s2) * norm_c
            return jnp.maximum(d, 1e-15)

        gt_dist = normal_dist(hr_gt_bin)
        pr_dist = normal_dist(hr_pred_bin)
        kl_terms = gt_dist * (jnp.log(gt_dist) - jnp.log(pr_dist))
        loss_hr = jnp.sum(jnp.where(valid, kl_terms, 0.0), axis=-1, keepdims=True)

        # ---- Neg-Pearson from the accumulated f32 sums ----
        nf = jnp.float32(n_total)
        sx = pear_ref[0:1, :]
        sy = pear_ref[1:2, :]
        sxy = pear_ref[2:3, :]
        sx2 = pear_ref[3:4, :]
        sy2 = pear_ref[4:5, :]
        pearson = (nf * sxy - sx * sy) / jnp.sqrt(
            (nf * sx2 - sx * sx) * (nf * sy2 - sy * sy))
        loss_time = 1.0 - pearson
        # matches the torch module: NaN loss_time -> 0
        loss_time = jnp.where(loss_time != loss_time, 0.0, loss_time)

        loss_ref[...] = (0.2 * loss_time + loss_ce + loss_hr).astype(jnp.float32)


# --------------------------------------------------------------------------
# Wrapper: host-side prep + one pallas_call (K axis tiled)
# --------------------------------------------------------------------------
def phythmformer_loss(pred_ppg, labels, fps, diff_flag=1, std=3.0):
    pred = pred_ppg.reshape(-1).astype(jnp.float32)
    lab = labels.reshape(-1).astype(jnp.float32)
    n_total = pred.shape[0]

    # contraction tile / zero padding of the time axis
    if n_total <= TK_MAX:
        tk = max(512, -(-n_total // 512) * 512)
    else:
        tk = TK_MAX
    n_pad = -(-n_total // tk) * tk
    n_steps = n_pad // tk
    pad_n = n_pad - n_total

    # TODO(synk): the reference calculate_hr/calculate_psd use scipy detrend +
    # Butterworth filtfilt + Welch/peak detection; approximated here by cumsum
    # (diff_flag) followed by the same in-band windowed power spectrum + argmax.
    if diff_flag:
        pred_proc = jnp.cumsum(pred)
        lab_proc = jnp.cumsum(lab)
    else:
        pred_proc, lab_proc = pred, lab

    # Demean / rescale before the bf16 cast: argmax and sum-normalized CE are
    # DC/scale invariant, and the O(N)-growing cumsum would otherwise lose the
    # in-band spectrum to bf16's 8-bit mantissa for long signals.
    def _norm(v):
        v = v - jnp.mean(v)
        return v / (jnp.std(v) + 1e-6)

    def _pad(v):
        return jnp.pad(v, (0, pad_n))

    zeros = jnp.zeros((n_pad,), jnp.float32)
    xs = jnp.stack([_pad(_norm(pred)), _pad(_norm(pred_proc)), _pad(_norm(lab_proc)),
                    zeros, zeros, zeros, zeros, zeros], axis=0)        # (8, n_pad)
    xs_bf = xs.astype(jnp.bfloat16)          # bf16 operands, f32 MXU accumulation

    # packed f32 stream for the exact Pearson (shift/scale sensitive -> keep raw)
    pxy = jnp.stack([_pad(pred), _pad(lab)], axis=0)                    # (2, n_pad)

    dft_bf = _make_windowed_dft_np(n_total, n_pad, float(fps))          # numpy const

    out = pl.pallas_call(
        functools.partial(_fused_loss_kernel, n_total, float(std)),
        out_shape=jax.ShapeDtypeStruct((1, 1), jnp.float32),
        grid=(n_steps,),
        in_specs=[pl.BlockSpec((SPEC_ROWS, tk), lambda i: (0, i)),
                  pl.BlockSpec((tk, DFT_COLS), lambda i: (i, 0)),
                  pl.BlockSpec((2, tk), lambda i: (0, i))],
        out_specs=pl.BlockSpec((1, 1), lambda i: (0, 0)),
        scratch_shapes=[pltpu.VMEM((SPEC_ROWS, DFT_COLS), jnp.float32),
                        pltpu.VMEM((8, 1), jnp.float32)],
        compiler_params=pltpu.CompilerParams(
            dimension_semantics=("arbitrary",)),
        # TODO(synk): on v7x, split the K axis into two "parallel" halves with
        # per-core partial (8,256)+Pearson outputs to use both TensorCores, and
        # cast the DFT stream to fp8 e4m3 (native MXU dtype there).
    )(xs_bf, dft_bf, pxy)
    return out[0, 0]


if __name__ == "__main__":
    key = jax.random.PRNGKey(0)
    B, T = 2, 128               # flattened N = 256
    FPS = 30.0
    DIFF_FLAG = 1

    t = jnp.arange(B * T, dtype=jnp.float32) / FPS
    hr_hz = 1.5                 # 90 bpm, inside the 45..150 bpm band
    k1, k2 = jax.random.split(key)
    clean = jnp.sin(2.0 * math.pi * hr_hz * t)
    pred_ppg = (clean + 0.10 * jax.random.normal(k1, (B * T,))).reshape(B, T)
    labels = (clean + 0.05 * jax.random.normal(k2, (B * T,))).reshape(B, T)

    loss_fn = jax.jit(lambda p, l: phythmformer_loss(p, l, fps=FPS, diff_flag=DIFF_FLAG))
    loss = loss_fn(pred_ppg, labels)
    jax.block_until_ready(loss)
    assert jnp.isfinite(loss), f"loss is not finite: {loss}"
    print("KERNEL_OK")
</pallas_src>

<mosaic_0001>
module attributes {stable_mosaic.version = 11 : i64} {
  func.func @_fused_loss_kernel(%arg0: i32, %arg1: memref<8x512xbf16, #tpu.memory_space<vmem>>, %arg2: memref<512x256xbf16, #tpu.memory_space<vmem>>, %arg3: memref<2x512xf32, #tpu.memory_space<vmem>>, %arg4: memref<1x1xf32, #tpu.memory_space<vmem>>, %arg5: memref<8x256xf32, #tpu.memory_space<vmem>>, %arg6: memref<8x1xf32, #tpu.memory_space<vmem>>) attributes {dimension_semantics = [#tpu.dimension_semantics<arbitrary>], iteration_bounds = array<i64: 1>, scalar_prefetch = 0 : i64, scratch_operands = 2 : i64, tpu.core_type = #tpu.core_type<tc>, window_params = [{transform_indices = @transform_0, window_bounds = array<i64: 8, 512>}, {transform_indices = @transform_1, window_bounds = array<i64: 512, 256>}, {transform_indices = @transform_2, window_bounds = array<i64: 2, 512>}, {pipeline_mode = #tpu.pipeline_mode<synchronous>, transform_indices = @transform_3, window_bounds = array<i64: 1, 1>}]} {
    %c0_i32 = arith.constant 0 : i32
    %0 = arith.cmpi eq, %arg0, %c0_i32 : i32
    %1 = arith.extui %0 : i1 to i32
    %c0_i32_0 = arith.constant 0 : i32
    %2 = arith.cmpi ne, %1, %c0_i32_0 : i32
    scf.if %2 {
      %cst_35 = arith.constant 0.000000e+00 : f32
      %42 = vector.broadcast %cst_35 : f32 to vector<8x256xf32>
      %c0_36 = arith.constant 0 : index
      %c0_37 = arith.constant 0 : index
      %43 = vector.load %arg5[%c0_36, %c0_37] : memref<8x256xf32, #tpu.memory_space<vmem>>, vector<8x256xf32>
      tpu.vector_store %arg5[%c0_36, %c0_37], %42 {strides = array<i32>} : memref<8x256xf32, #tpu.memory_space<vmem>>, vector<8x256xf32>,
      %cst_38 = arith.constant 0.000000e+00 : f32
      %44 = vector.broadcast %cst_38 : f32 to vector<8x1xf32>
      %c0_39 = arith.constant 0 : index
      %c0_40 = arith.constant 0 : index
      %45 = vector.load %arg6[%c0_39, %c0_40] : memref<8x1xf32, #tpu.memory_space<vmem>>, vector<8x1xf32>
      tpu.vector_store %arg6[%c0_39, %c0_40], %44 {strides = array<i32>} : memref<8x1xf32, #tpu.memory_space<vmem>>, vector<8x1xf32>,
    } else {
    }
    %c0 = arith.constant 0 : index
    %c0_1 = arith.constant 0 : index
    %3 = vector.load %arg5[%c0, %c0_1] : memref<8x256xf32, #tpu.memory_space<vmem>>, vector<8x256xf32>
    %c0_2 = arith.constant 0 : index
    %c0_3 = arith.constant 0 : index
    %4 = vector.load %arg1[%c0_2, %c0_3] : memref<8x512xbf16, #tpu.memory_space<vmem>>, vector<8x512xbf16>
    %c0_4 = arith.constant 0 : index
    %c0_5 = arith.constant 0 : index
    %5 = vector.load %arg2[%c0_4, %c0_5] : memref<512x256xbf16, #tpu.memory_space<vmem>>, vector<512x256xbf16>
    %cst = arith.constant dense<0.000000e+00> : vector<8x256xf32>
    %6 = tpu.matmul %4, %5, %cst {dimension_numbers = #tpu.dot_dimension_numbers<[1], [0], [0], [1], [0, 0, 1, 1], [], []>} : vector<8x512xbf16>, vector<512x256xbf16>, vector<8x256xf32> -> vector<8x256xf32>
    %7 = arith.addf %3, %6 : vector<8x256xf32>
    %c0_6 = arith.constant 0 : index
    %c0_7 = arith.constant 0 : index
    %8 = vector.load %arg5[%c0_6, %c0_7] : memref<8x256xf32, #tpu.memory_space<vmem>>, vector<8x256xf32>
    tpu.vector_store %arg5[%c0_6, %c0_7], %7 {strides = array<i32>} : memref<8x256xf32, #tpu.memory_space<vmem>>, vector<8x256xf32>,
    %c0_8 = arith.constant 0 : index
    %c0_9 = arith.constant 0 : index
    %9 = vector.load %arg3[%c0_8, %c0_9] : memref<2x512xf32, #tpu.memory_space<vmem>>, vector<1x512xf32>
    %c1 = arith.constant 1 : index
    %c0_10 = arith.constant 0 : index
    %10 = vector.load %arg3[%c1, %c0_10] : memref<2x512xf32, #tpu.memory_space<vmem>>, vector<1x512xf32>
    %c0_11 = arith.constant 0 : index
    %c0_12 = arith.constant 0 : index
    %11 = vector.load %arg6[%c0_11, %c0_12] : memref<8x1xf32, #tpu.memory_space<vmem>>, vector<1x1xf32>
    %cst_13 = arith.constant dense<0.000000e+00> : vector<1xf32>
    %12 = vector.multi_reduction <add>, %9, %cst_13 [1] : vector<1x512xf32> to vector<1xf32>
    %13 = vector.shape_cast %12 : vector<1xf32> to vector<1x1xf32>
    %14 = arith.addf %11, %13 : vector<1x1xf32>
    %c0_14 = arith.constant 0 : index
    %c0_15 = arith.constant 0 : index
    %15 = vector.load %arg6[%c0_14, %c0_15] : memref<8x1xf32, #tpu.memory_space<vmem>>, vector<1x1xf32>
    tpu.vector_store %arg6[%c0_14, %c0_15], %14 {strides = array<i32>} : memref<8x1xf32, #tpu.memory_space<vmem>>, vector<1x1xf32>,
    %c1_16 = arith.constant 1 : index
    %c0_17 = arith.constant 0 : index
    %16 = vector.load %arg6[%c1_16, %c0_17] : memref<8x1xf32, #tpu.memory_space<vmem>>, vector<1x1xf32>
    %cst_18 = arith.constant dense<0.000000e+00> : vector<1xf32>
    %17 = vector.multi_reduction <add>, %10, %cst_18 [1] : vector<1x512xf32> to vector<1xf32>
    %18 = vector.shape_cast %17 : vector<1xf32> to vector<1x1xf32>
    %19 = arith.addf %16, %18 : vector<1x1xf32>
    %c1_19 = arith.constant 1 : index
    %c0_20 = arith.constant 0 : index
    %20 = vector.load %arg6[%c1_19, %c0_20] : memref<8x1xf32, #tpu.memory_space<vmem>>, vector<1x1xf32>
    tpu.vector_store %arg6[%c1_19, %c0_20], %19 {strides = array<i32>} : memref<8x1xf32, #tpu.memory_space<vmem>>, vector<1x1xf32>,
    %c2 = arith.constant 2 : index
    %c0_21 = arith.constant 0 : index
    %21 = vector.load %arg6[%c2, %c0_21] : memref<8x1xf32, #tpu.memory_space<vmem>>, vector<1x1xf32>
    %22 = arith.mulf %9, %10 : vector<1x512xf32>
    %cst_22 = arith.constant dense<0.000000e+00> : vector<1xf32>
    %23 = vector.multi_reduction <add>, %22, %cst_22 [1] : vector<1x512xf32> to vector<1xf32>
    %24 = vector.shape_cast %23 : vector<1xf32> to vector<1x1xf32>
    %25 = arith.addf %21, %24 : vector<1x1xf32>
    %c2_23 = arith.constant 2 : index
    %c0_24 = arith.constant 0 : index
    %26 = vector.load %arg6[%c2_23, %c0_24] : memref<8x1xf32, #tpu.memory_space<vmem>>, vector<1x1xf32>
    tpu.vector_store %arg6[%c2_23, %c0_24], %25 {strides = array<i32>} : memref<8x1xf32, #tpu.memory_space<vmem>>, vector<1x1xf32>,
    %c3 = arith.constant 3 : index
    %c0_25 = arith.constant 0 : index
    %27 = vector.load %arg6[%c3, %c0_25] : memref<8x1xf32, #tpu.memory_space<vmem>>, vector<1x1xf32>
    %28 = arith.mulf %9, %9 : vector<1x512xf32>
    %cst_26 = arith.constant dense<0.000000e+00> : vector<1xf32>
    %29 = vector.multi_reduction <add>, %28, %cst_26 [1] : vector<1x512xf32> to vector<1xf32>
    %30 = vector.shape_cast %29 : vector<1xf32> to vector<1x1xf32>
    %31 = arith.addf %27, %30 : vector<1x1xf32>
    %c3_27 = arith.constant 3 : index
    %c0_28 = arith.constant 0 : index
    %32 = vector.load %arg6[%c3_27, %c0_28] : memref<8x1xf32, #tpu.memory_space<vmem>>, vector<1x1xf32>
    tpu.vector_store %arg6[%c3_27, %c0_28], %31 {strides = array<i32>} : memref<8x1xf32, #tpu.memory_space<vmem>>, vector<1x1xf32>,
    %c4 = arith.constant 4 : index
    %c0_29 = arith.constant 0 : index
    %33 = vector.load %arg6[%c4, %c0_29] : memref<8x1xf32, #tpu.memory_space<vmem>>, vector<1x1xf32>
    %34 = arith.mulf %10, %10 : vector<1x512xf32>
    %cst_30 = arith.constant dense<0.000000e+00> : vector<1xf32>
    %35 = vector.multi_reduction <add>, %34, %cst_30 [1] : vector<1x512xf32> to vector<1xf32>
    %36 = vector.shape_cast %35 : vector<1xf32> to vector<1x1xf32>
    %37 = arith.addf %33, %36 : vector<1x1xf32>
    %c4_31 = arith.constant 4 : index
    %c0_32 = arith.constant 0 : index
    %38 = vector.load %arg6[%c4_31, %c0_32] : memref<8x1xf32, #tpu.memory_space<vmem>>, vector<1x1xf32>
    tpu.vector_store %arg6[%c4_31, %c0_32], %37 {strides = array<i32>} : memref<8x1xf32, #tpu.memory_space<vmem>>, vector<1x1xf32>,
    %c0_i32_33 = arith.constant 0 : i32
    %39 = arith.cmpi eq, %arg0, %c0_i32_33 : i32
    %40 = arith.extui %39 : i1 to i32
    %c0_i32_34 = arith.constant 0 : i32
    %41 = arith.cmpi ne, %40, %c0_i32_34 : i32
    scf.if %41 {
      %c0_35 = arith.constant 0 : index
      %c0_36 = arith.constant 0 : index
      %42 = vector.load %arg5[%c0_35, %c0_36] : memref<8x256xf32, #tpu.memory_space<vmem>>, vector<8x256xf32>
      %43 = vector.extract_strided_slice %42 {offsets = [0, 0], sizes = [8, 128], strides = [1, 1]} : vector<8x256xf32> to vector<8x128xf32>
      %44 = vector.extract_strided_slice %42 {offsets = [0, 128], sizes = [8, 128], strides = [1, 1]} : vector<8x256xf32> to vector<8x128xf32>
      %45 = arith.mulf %43, %43 : vector<8x128xf32>
      %46 = arith.mulf %44, %44 : vector<8x128xf32>
      %47 = arith.addf %45, %46 : vector<8x128xf32>
      %48 = tpu.iota {dimensions = array<i32: 1>} : vector<1x128xi32>
      %49 = arith.sitofp %48 : vector<1x128xi32> to vector<1x128xf32>
      %cst_37 = arith.constant 1.050000e+02 : f32
      %50 = vector.broadcast %cst_37 : f32 to vector<1x128xf32>
      %51 = arith.cmpf olt, %49, %50 : vector<1x128xf32>
      %52 = vector.extract_strided_slice %47 {offsets = [0, 0], sizes = [1, 128], strides = [1, 1]} : vector<8x128xf32> to vector<1x128xf32>
      %53 = vector.extract_strided_slice %47 {offsets = [1, 0], sizes = [1, 128], strides = [1, 1]} : vector<8x128xf32> to vector<1x128xf32>
      %54 = vector.extract_strided_slice %47 {offsets = [2, 0], sizes = [1, 128], strides = [1, 1]} : vector<8x128xf32> to vector<1x128xf32>
      %cst_38 = arith.constant -1.000000e+00 : f32
      %55 = vector.broadcast %cst_38 : f32 to vector<1x128xf32>
      %56 = arith.select %51, %54, %55 : vector<1x128xi1>, vector<1x128xf32>
      %cst_39 = arith.constant dense<0xFF800000> : vector<1xf32>
      %57 = vector.multi_reduction <maximumf>, %56, %cst_39 [1] : vector<1x128xf32> to vector<1xf32>
      %58 = vector.shape_cast %57 : vector<1xf32> to vector<1x1xf32>
      %59 = vector.broadcast %58 : vector<1x1xf32> to vector<1x128xf32>
      %60 = arith.cmpf oeq, %56, %59 : vector<1x128xf32>
      %cst_40 = arith.constant 1.280000e+02 : f32
      %61 = vector.broadcast %cst_40 : f32 to vector<1x128xf32>
      %62 = arith.select %60, %49, %61 : vector<1x128xi1>, vector<1x128xf32>
      %cst_41 = arith.constant dense<0x7F800000> : vector<1xf32>
      %63 = vector.multi_reduction <minimumf>, %62, %cst_41 [1] : vector<1x128xf32> to vector<1xf32>
      %64 = vector.shape_cast %63 : vector<1xf32> to vector<1x1xf32>
      %cst_42 = arith.constant -1.000000e+00 : f32
      %65 = vector.broadcast %cst_42 : f32 to vector<1x128xf32>
      %66 = arith.select %51, %53, %65 : vector<1x128xi1>, vector<1x128xf32>
      %cst_43 = arith.constant dense<0xFF800000> : vector<1xf32>
      %67 = vector.multi_reduction <maximumf>, %66, %cst_43 [1] : vector<1x128xf32> to vector<1xf32>
      %68 = vector.shape_cast %67 : vector<1xf32> to vector<1x1xf32>
      %69 = vector.broadcast %68 : vector<1x1xf32> to vector<1x128xf32>
      %70 = arith.cmpf oeq, %66, %69 : vector<1x128xf32>
      %cst_44 = arith.constant 1.280000e+02 : f32
      %71 = vector.broadcast %cst_44 : f32 to vector<1x128xf32>
      %72 = arith.select %70, %49, %71 : vector<1x128xi1>, vector<1x128xf32>
      %cst_45 = arith.constant dense<0x7F800000> : vector<1xf32>
      %73 = vector.multi_reduction <minimumf>, %72, %cst_45 [1] : vector<1x128xf32> to vector<1xf32>
      %74 = vector.shape_cast %73 : vector<1xf32> to vector<1x1xf32>
      %cst_46 = arith.constant dense<0.000000e+00> : vector<1xf32>
      %75 = vector.multi_reduction <add>, %52, %cst_46 [1] : vector<1x128xf32> to vector<1xf32>
      %76 = vector.shape_cast %75 : vector<1xf32> to vector<1x1xf32>
      %cst_47 = arith.constant 9.99999996E-13 : f32
      %77 = vector.broadcast %cst_47 : f32 to vector<1x1xf32>
      %78 = arith.addf %76, %77 : vector<1x1xf32>
      %79 = vector.broadcast %78 : vector<1x1xf32> to vector<1x128xf32>
      %80 = arith.divf %52, %79 : vector<1x128xf32>
      %cst_48 = arith.constant -1.000000e+30 : f32
      %81 = vector.broadcast %cst_48 : f32 to vector<1x128xf32>
      %82 = arith.select %51, %80, %81 : vector<1x128xi1>, vector<1x128xf32>
      %cst_49 = arith.constant dense<0xFF800000> : vector<1xf32>
      %83 = vector.multi_reduction <maximumf>, %82, %cst_49 [1] : vector<1x128xf32> to vector<1xf32>
      %84 = vector.shape_cast %83 : vector<1xf32> to vector<1x1xf32>
      %85 = vector.broadcast %84 : vector<1x1xf32> to vector<1x128xf32>
      %86 = arith.subf %82, %85 : vector<1x128xf32>
      %87 = math.exp %86 : vector<1x128xf32>
      %cst_50 = arith.constant dense<0.000000e+00> : vector<1xf32>
      %88 = vector.multi_reduction <add>, %87, %cst_50 [1] : vector<1x128xf32> to vector<1xf32>
      %89 = vector.shape_cast %88 : vector<1xf32> to vector<1x1xf32>
      %90 = math.log %89 : vector<1x1xf32>
      %91 = arith.addf %84, %90 : vector<1x1xf32>
      %92 = vector.broadcast %64 : vector<1x1xf32> to vector<1x128xf32>
      %93 = arith.cmpf oeq, %49, %92 : vector<1x128xf32>
      %cst_51 = arith.constant 0.000000e+00 : f32
      %94 = vector.broadcast %cst_51 : f32 to vector<1x128xf32>
      %95 = arith.select %93, %80, %94 : vector<1x128xi1>, vector<1x128xf32>
      %cst_52 = arith.constant dense<0.000000e+00> : vector<1xf32>
      %96 = vector.multi_reduction <add>, %95, %cst_52 [1] : vector<1x128xf32> to vector<1xf32>
      %97 = vector.shape_cast %96 : vector<1xf32> to vector<1x1xf32>
      %98 = arith.subf %91, %97 : vector<1x1xf32>
      %99 = vector.broadcast %64 : vector<1x1xf32> to vector<1x128xf32>
      %100 = arith.subf %49, %99 : vector<1x128xf32>
      %cst_53 = arith.constant 0.000000e+00 : f32
      %101 = vector.broadcast %cst_53 : f32 to vector<1x128xf32>
      %102 = arith.subf %101, %100 : vector<1x128xf32>
      %103 = vector.broadcast %64 : vector<1x1xf32> to vector<1x128xf32>
      %104 = arith.subf %49, %103 : vector<1x128xf32>
      %105 = arith.mulf %102, %104 : vector<1x128xf32>
      %cst_54 = arith.constant 0.055555556 : f32
      %106 = vector.broadcast %cst_54 : f32 to vector<1x128xf32>
      %107 = arith.mulf %105, %106 : vector<1x128xf32>
      %108 = math.exp %107 : vector<1x128xf32>
      %cst_55 = arith.constant 0.132980764 : f32
      %109 = vector.broadcast %cst_55 : f32 to vector<1x128xf32>
      %110 = arith.mulf %108, %109 : vector<1x128xf32>
      %cst_56 = arith.constant 1.000000e-15 : f32
      %111 = vector.broadcast %cst_56 : f32 to vector<1x128xf32>
      %112 = arith.maximumf %110, %111 : vector<1x128xf32>
      %113 = vector.broadcast %74 : vector<1x1xf32> to vector<1x128xf32>
      %114 = arith.subf %49, %113 : vector<1x128xf32>
      %cst_57 = arith.constant 0.000000e+00 : f32
      %115 = vector.broadcast %cst_57 : f32 to vector<1x128xf32>
      %116 = arith.subf %115, %114 : vector<1x128xf32>
      %117 = vector.broadcast %74 : vector<1x1xf32> to vector<1x128xf32>
      %118 = arith.subf %49, %117 : vector<1x128xf32>
      %119 = arith.mulf %116, %118 : vector<1x128xf32>
      %cst_58 = arith.constant 0.055555556 : f32
      %120 = vector.broadcast %cst_58 : f32 to vector<1x128xf32>
      %121 = arith.mulf %119, %120 : vector<1x128xf32>
      %122 = math.exp %121 : vector<1x128xf32>
      %cst_59 = arith.constant 0.132980764 : f32
      %123 = vector.broadcast %cst_59 : f32 to vector<1x128xf32>
      %124 = arith.mulf %122, %123 : vector<1x128xf32>
      %cst_60 = arith.constant 1.000000e-15 : f32
      %125 = vector.broadcast %cst_60 : f32 to vector<1x128xf32>
      %126 = arith.maximumf %124, %125 : vector<1x128xf32>
      %127 = math.log %112 : vector<1x128xf32>
      %128 = math.log %126 : vector<1x128xf32>
      %129 = arith.subf %127, %128 : vector<1x128xf32>
      %130 = arith.mulf %112, %129 : vector<1x128xf32>
      %cst_61 = arith.constant 0.000000e+00 : f32
      %131 = vector.broadcast %cst_61 : f32 to vector<1x128xf32>
      %132 = arith.select %51, %130, %131 : vector<1x128xi1>, vector<1x128xf32>
      %cst_62 = arith.constant dense<0.000000e+00> : vector<1xf32>
      %133 = vector.multi_reduction <add>, %132, %cst_62 [1] : vector<1x128xf32> to vector<1xf32>
      %134 = vector.shape_cast %133 : vector<1xf32> to vector<1x1xf32>
      %c0_63 = arith.constant 0 : index
      %c0_64 = arith.constant 0 : index
      %135 = vector.load %arg6[%c0_63, %c0_64] : memref<8x1xf32, #tpu.memory_space<vmem>>, vector<1x1xf32>
      %c1_65 = arith.constant 1 : index
      %c0_66 = arith.constant 0 : index
      %136 = vector.load %arg6[%c1_65, %c0_66] : memref<8x1xf32, #tpu.memory_space<vmem>>, vector<1x1xf32>
      %c2_67 = arith.constant 2 : index
      %c0_68 = arith.constant 0 : index
      %137 = vector.load %arg6[%c2_67, %c0_68] : memref<8x1xf32, #tpu.memory_space<vmem>>, vector<1x1xf32>
      %c3_69 = arith.constant 3 : index
      %c0_70 = arith.constant 0 : index
      %138 = vector.load %arg6[%c3_69, %c0_70] : memref<8x1xf32, #tpu.memory_space<vmem>>, vector<1x1xf32>
      %c4_71 = arith.constant 4 : index
      %c0_72 = arith.constant 0 : index
      %139 = vector.load %arg6[%c4_71, %c0_72] : memref<8x1xf32, #tpu.memory_space<vmem>>, vector<1x1xf32>
      %cst_73 = arith.constant 2.560000e+02 : f32
      %140 = vector.broadcast %cst_73 : f32 to vector<1x1xf32>
      %141 = arith.mulf %140, %137 : vector<1x1xf32>
      %142 = arith.mulf %135, %136 : vector<1x1xf32>
      %143 = arith.subf %141, %142 : vector<1x1xf32>
      %cst_74 = arith.constant 2.560000e+02 : f32
      %144 = vector.broadcast %cst_74 : f32 to vector<1x1xf32>
      %145 = arith.mulf %144, %138 : vector<1x1xf32>
      %146 = arith.mulf %135, %135 : vector<1x1xf32>
      %147 = arith.subf %145, %146 : vector<1x1xf32>
      %cst_75 = arith.constant 2.560000e+02 : f32
      %148 = vector.broadcast %cst_75 : f32 to vector<1x1xf32>
      %149 = arith.mulf %148, %139 : vector<1x1xf32>
      %150 = arith.mulf %136, %136 : vector<1x1xf32>
      %151 = arith.subf %149, %150 : vector<1x1xf32>
      %152 = arith.mulf %147, %151 : vector<1x1xf32>
      %153 = math.sqrt %152 : vector<1x1xf32>
      %154 = arith.divf %143, %153 : vector<1x1xf32>
      %cst_76 = arith.constant 1.000000e+00 : f32
      %155 = vector.broadcast %cst_76 : f32 to vector<1x1xf32>
      %156 = arith.subf %155, %154 : vector<1x1xf32>
      %157 = arith.cmpf one, %156, %156 : vector<1x1xf32>
      %cst_77 = arith.constant 0.000000e+00 : f32
      %158 = vector.broadcast %cst_77 : f32 to vector<1x1xf32>
      %159 = arith.select %157, %158, %156 : vector<1x1xi1>, vector<1x1xf32>
      %cst_78 = arith.constant 2.000000e-01 : f32
      %160 = vector.broadcast %cst_78 : f32 to vector<1x1xf32>
      %161 = arith.mulf %160, %159 : vector<1x1xf32>
      %162 = arith.addf %161, %98 : vector<1x1xf32>
      %163 = arith.addf %162, %134 : vector<1x1xf32>
      %c0_79 = arith.constant 0 : index
      %c0_80 = arith.constant 0 : index
      %164 = vector.load %arg4[%c0_79, %c0_80] : memref<1x1xf32, #tpu.memory_space<vmem>>, vector<1x1xf32>
      tpu.vector_store %arg4[%c0_79, %c0_80], %163 {strides = array<i32>} : memref<1x1xf32, #tpu.memory_space<vmem>>, vector<1x1xf32>,
    } else {
    }
    return
  }
  func.func @transform_0(%arg0: i32) -> (i32, i32) {
    %c0_i32 = arith.constant 0 : i32
    %c0_i32_0 = arith.constant 0 : i32
    return %c0_i32, %arg0 : i32, i32
  }
  func.func @transform_1(%arg0: i32) -> (i32, i32) {
    %c0_i32 = arith.constant 0 : i32
    %c0_i32_0 = arith.constant 0 : i32
    return %arg0, %c0_i32 : i32, i32
  }
  func.func @transform_2(%arg0: i32) -> (i32, i32) {
    %c0_i32 = arith.constant 0 : i32
    %c0_i32_0 = arith.constant 0 : i32
    return %c0_i32, %arg0 : i32, i32
  }
  func.func @transform_3(%arg0: i32) -> (i32, i32) {
    %c0_i32 = arith.constant 0 : i32
    %c0_i32_0 = arith.constant 0 : i32
    %c0_i32_1 = arith.constant 0 : i32
    return %c0_i32, %c0_i32_0 : i32, i32
  }
}

</mosaic_0001>

<llo_original>
// kernel: _lambda_.1
$region0: #{_lambda_.1}
  #allocation0 [shape = 'u32[]', space=smem, size = 0x4, offset = 0x4, fixed_abs, tag = 'smem constant byte address 0x4 - core index']
  #allocation1 [shape = 'u32[144,128]{1,0:T(1,128)}', space=vmem, size = 0x12000, scoped, tag = 'internal scratch']
  #allocation2 [shape = 'f32[8,256]{1,0:T(8,128)}', space=vmem, size = 0x2000, scoped, tag = 'scratch operand']
  #allocation3 [shape = 'f32[8,1]{1,0:T(8,128)}', space=vmem, size = 0x1000, scoped, tag = 'scratch operand']
  %s0 = inlined_call_operand.vmem [shape: bf16[8,512], index: 0, kind: input, shape index: {}]
  %s1 = inlined_call_operand.vmem [shape: bf16[512,256], index: 1, kind: input, shape index: {}]
  %s2 = inlined_call_operand.vmem [shape: f32[2,512], index: 2, kind: input, shape index: {}]
  %s3 = inlined_call_operand.hbm [shape: f32[1,1], index: 3, kind: output, shape index: {}]
  %s4 = sld [smem:[#allocation0]]
  $region30: #{_lambda_.1} parent=0
    _
  %s6 = ssub.s32 1, %s4
  %s7 = scalar_select 0, %s6, %s4
  $region1: #{_lambda_.1} parent=0
    #allocation4 [shape = 'u8[512]{0}', space=vmem, size = 0x400, scoped, tag = 'output window, operand 0, single buffered']
    #allocation5 [shape = 's32[1]{0}', space=sflag, size = 0x4, scoped, tag = 'scoped memory for _lambda_.1']
    %8 = vsyncpa [#allocation5], 0
    // Predicated region
    $region2: #{_lambda_.1} parent=1 // pred_check
      _
    $region3: #{_lambda_.1} parent=1 // pred_check_branch
      %10 = sbr.rel (0) target = $region5
    $region4: #{_lambda_.1} parent=1 // pred_region
      _
    $region5: #{_lambda_.1} parent=1 // pred_fallthru
      _
    // Predicated region
    $region6: #{_lambda_.1} parent=1 // pred_check
      _
    $region7: #{_lambda_.1} parent=1 // pred_check_branch
      %12 = sbr.rel (0) target = $region9
    $region8: #{_lambda_.1} parent=1 // pred_region
      _
    $region9: #{_lambda_.1} parent=1 // pred_fallthru
      _
    // Predicated region
    $region10: #{_lambda_.1} parent=1 // pred_check
      _
    $region11: #{_lambda_.1} parent=1 // pred_check_branch
      %14 = sbr.rel (0) target = $region13
    $region12: #{_lambda_.1} parent=1 // pred_region
      _
    $region13: #{_lambda_.1} parent=1 // pred_fallthru
      _
    %p15 = scmp.eq.s32.totalorder 0, 0
    // Predicated region
    $region14: #{_lambda_.1} parent=1 // pred_check
      %p16 = pneg %p15
    $region15: #{_lambda_.1} parent=1 // pred_check_branch
      %18 = sbr.rel (%p16) target = $region17
    $region16: #{_lambda_.1} parent=1 // pred_region
      %19 = vst [vmem:[#allocation2] sm:$0xff] 0.0
      %20 = vst [vmem:[#allocation2 + $0x8] sm:$0xff] 0.0
      %vm21 = vcmask 7168
      %22 = vst.msk [vmem:[#allocation3] sm:$0xff] %vm21, 0.0
    $region17: #{_lambda_.1} parent=1 // pred_fallthru
      _
    %v23 = vld [vmem:[#allocation2] sm:$0xff]
    %v24 = vld [vmem:[#allocation2 + $0x8] sm:$0xff]
    %v25 = vld [vmem:[%s0] sm:$0xff]
    %v26 = vld [vmem:[%s0 + $0x8] sm:$0xff]
    %v27 = vld [vmem:[%s1] sm:$0xff]
    %v28 = vld [vmem:[%s1 + $0x8] sm:$0xff]
    %v29 = vld [vmem:[%s1 + $0x10] sm:$0xff]
    %v30 = vld [vmem:[%s1 + $0x18] sm:$0xff]
    %v31 = vld [vmem:[%s1 + $0x20] sm:$0xff]
    %v32 = vld [vmem:[%s1 + $0x28] sm:$0xff]
    %v33 = vld [vmem:[%s1 + $0x30] sm:$0xff]
    %v34 = vld [vmem:[%s1 + $0x38] sm:$0xff]
    %v35 = vld [vmem:[%s1 + $0x40] sm:$0xff]
    %v36 = vld [vmem:[%s1 + $0x48] sm:$0xff]
    %v37 = vld [vmem:[%s1 + $0x50] sm:$0xff]
    %v38 = vld [vmem:[%s1 + $0x58] sm:$0xff]
    %v39 = vld [vmem:[%s1 + $0x60] sm:$0xff]
    %v40 = vld [vmem:[%s1 + $0x68] sm:$0xff]
    %v41 = vld [vmem:[%s1 + $0x70] sm:$0xff]
    %v42 = vld [vmem:[%s1 + $0x78] sm:$0xff]
    %v43 = vld [vmem:[%s1 + $0x80] sm:$0xff]
    %v44 = vld [vmem:[%s1 + $0x88] sm:$0xff]
    %v45 = vld [vmem:[%s1 + $0x90] sm:$0xff]
    %v46 = vld [vmem:[%s1 + $0x98] sm:$0xff]
    %v47 = vld [vmem:[%s1 + $0xa0] sm:$0xff]
    %v48 = vld [vmem:[%s1 + $0xa8] sm:$0xff]
    %v49 = vld [vmem:[%s1 + $0xb0] sm:$0xff]
    %v50 = vld [vmem:[%s1 + $0xb8] sm:$0xff]
    %v51 = vld [vmem:[%s1 + $0xc0] sm:$0xff]
    %v52 = vld [vmem:[%s1 + $0xc8] sm:$0xff]
    %v53 = vld [vmem:[%s1 + $0xd0] sm:$0xff]
    %v54 = vld [vmem:[%s1 + $0xd8] sm:$0xff]
    %v55 = vld [vmem:[%s1 + $0xe0] sm:$0xff]
    %v56 = vld [vmem:[%s1 + $0xe8] sm:$0xff]
    %v57 = vld [vmem:[%s1 + $0xf0] sm:$0xff]
    %v58 = vld [vmem:[%s1 + $0xf8] sm:$0xff]
    %v59 = vld [vmem:[%s1 + $0x100] sm:$0xff]
    %v60 = vld [vmem:[%s1 + $0x108] sm:$0xff]
    %v61 = vld [vmem:[%s1 + $0x110] sm:$0xff]
    %v62 = vld [vmem:[%s1 + $0x118] sm:$0xff]
    %v63 = vld [vmem:[%s1 + $0x120] sm:$0xff]
    %v64 = vld [vmem:[%s1 + $0x128] sm:$0xff]
    %v65 = vld [vmem:[%s1 + $0x130] sm:$0xff]
    %v66 = vld [vmem:[%s1 + $0x138] sm:$0xff]
    %v67 = vld [vmem:[%s1 + $0x140] sm:$0xff]
    %v68 = vld [vmem:[%s1 + $0x148] sm:$0xff]
    %v69 = vld [vmem:[%s1 + $0x150] sm:$0xff]
    %v70 = vld [vmem:[%s1 + $0x158] sm:$0xff]
    %v71 = vld [vmem:[%s1 + $0x160] sm:$0xff]
    %v72 = vld [vmem:[%s1 + $0x168] sm:$0xff]
    %v73 = vld [vmem:[%s1 + $0x170] sm:$0xff]
    %v74 = vld [vmem:[%s1 + $0x178] sm:$0xff]
    %v75 = vld [vmem:[%s1 + $0x180] sm:$0xff]
    %v76 = vld [vmem:[%s1 + $0x188] sm:$0xff]
    %v77 = vld [vmem:[%s1 + $0x190] sm:$0xff]
    %v78 = vld [vmem:[%s1 + $0x198] sm:$0xff]
    %v79 = vld [vmem:[%s1 + $0x1a0] sm:$0xff]
    %v80 = vld [vmem:[%s1 + $0x1a8] sm:$0xff]
    %v81 = vld [vmem:[%s1 + $0x1b0] sm:$0xff]
    %v82 = vld [vmem:[%s1 + $0x1b8] sm:$0xff]
    %v83 = vld [vmem:[%s1 + $0x1c0] sm:$0xff]
    %v84 = vld [vmem:[%s1 + $0x1c8] sm:$0xff]
    %v85 = vld [vmem:[%s1 + $0x1d0] sm:$0xff]
    %v86 = vld [vmem:[%s1 + $0x1d8] sm:$0xff]
    %v87 = vld [vmem:[%s1 + $0x1e0] sm:$0xff]
    %v88 = vld [vmem:[%s1 + $0x1e8] sm:$0xff]
    %v89 = vld [vmem:[%s1 + $0x1f0] sm:$0xff]
    %v90 = vld [vmem:[%s1 + $0x1f8] sm:$0xff]
    %v93 = vunpack.c.l.b16 %v25
    %v94 = vunpack.c.h.b16 %v25
    %v95 = vunpack.c.l.b16 %v26
    %v96 = vunpack.c.h.b16 %v26
    %v97 = vpack.c.b16 %v93, %v93
    %v98 = vpack.c.b16 %v94, %v94
    %v99 = vpack.c.b16 %v95, %v95
    %v100 = vpack.c.b16 %v96, %v96
    %v169 = vunpack.c.l.b16 %v27
    %v170 = vunpack.c.h.b16 %v27
    %v171 = vunpack.c.l.b16 %v28
    %v172 = vunpack.c.h.b16 %v28
    %v173 = vunpack.c.l.b16 %v29
    %v174 = vunpack.c.h.b16 %v29
    %v175 = vunpack.c.l.b16 %v30
    %v176 = vunpack.c.h.b16 %v30
    %v177 = vunpack.c.l.b16 %v31
    %v178 = vunpack.c.h.b16 %v31
    %v179 = vunpack.c.l.b16 %v32
    %v180 = vunpack.c.h.b16 %v32
    %v181 = vunpack.c.l.b16 %v33
    %v182 = vunpack.c.h.b16 %v33
    %v183 = vunpack.c.l.b16 %v34
    %v184 = vunpack.c.h.b16 %v34
    %v185 = vunpack.c.l.b16 %v35
    %v186 = vunpack.c.h.b16 %v35
    %v187 = vunpack.c.l.b16 %v36
    %v188 = vunpack.c.h.b16 %v36
    %v189 = vunpack.c.l.b16 %v37
    %v190 = vunpack.c.h.b16 %v37
    %v191 = vunpack.c.l.b16 %v38
    %v192 = vunpack.c.h.b16 %v38
    %v193 = vunpack.c.l.b16 %v39
    %v194 = vunpack.c.h.b16 %v39
    %v195 = vunpack.c.l.b16 %v40
    %v196 = vunpack.c.h.b16 %v40
    %v197 = vunpack.c.l.b16 %v41
    %v198 = vunpack.c.h.b16 %v41
    %v199 = vunpack.c.l.b16 %v42
    %v200 = vunpack.c.h.b16 %v42
    %v201 = vunpack.c.l.b16 %v43
    %v202 = vunpack.c.h.b16 %v43
    %v203 = vunpack.c.l.b16 %v44
    %v204 = vunpack.c.h.b16 %v44
    %v205 = vunpack.c.l.b16 %v45
    %v206 = vunpack.c.h.b16 %v45
    %v207 = vunpack.c.l.b16 %v46
    %v208 = vunpack.c.h.b16 %v46
    %v209 = vunpack.c.l.b16 %v47
    %v210 = vunpack.c.h.b16 %v47
    %v211 = vunpack.c.l.b16 %v48
    %v212 = vunpack.c.h.b16 %v48
    %v213 = vunpack.c.l.b16 %v49
    %v214 = vunpack.c.h.b16 %v49
    %v215 = vunpack.c.l.b16 %v50
    %v216 = vunpack.c.h.b16 %v50
    %v217 = vunpack.c.l.b16 %v51
    %v218 = vunpack.c.h.b16 %v51
    %v219 = vunpack.c.l.b16 %v52
    %v220 = vunpack.c.h.b16 %v52
    %v221 = vunpack.c.l.b16 %v53
    %v222 = vunpack.c.h.b16 %v53
    %v223 = vunpack.c.l.b16 %v54
    %v224 = vunpack.c.h.b16 %v54
    %v225 = vunpack.c.l.b16 %v55
    %v226 = vunpack.c.h.b16 %v55
    %v227 = vunpack.c.l.b16 %v56
    %v228 = vunpack.c.h.b16 %v56
    %v229 = vunpack.c.l.b16 %v57
    %v230 = vunpack.c.h.b16 %v57
    %v231 = vunpack.c.l.b16 %v58
    %v232 = vunpack.c.h.b16 %v58
    %v233 = vunpack.c.l.b16 %v59
    %v234 = vunpack.c.h.b16 %v59
    %v235 = vunpack.c.l.b16 %v60
    %v236 = vunpack.c.h.b16 %v60
    %v237 = vunpack.c.l.b16 %v61
    %v238 = vunpack.c.h.b16 %v61
    %v239 = vunpack.c.l.b16 %v62
    %v240 = vunpack.c.h.b16 %v62
    %v241 = vunpack.c.l.b16 %v63
    %v242 = vunpack.c.h.b16 %v63
    %v243 = vunpack.c.l.b16 %v64
    %v244 = vunpack.c.h.b16 %v64
    %v245 = vunpack.c.l.b16 %v65
    %v246 = vunpack.c.h.b16 %v65
    %v247 = vunpack.c.l.b16 %v66
    %v248 = vunpack.c.h.b16 %v66
    %v249 = vunpack.c.l.b16 %v67
    %v250 = vunpack.c.h.b16 %v67
    %v251 = vunpack.c.l.b16 %v68
    %v252 = vunpack.c.h.b16 %v68
    %v253 = vunpack.c.l.b16 %v69
    %v254 = vunpack.c.h.b16 %v69
    %v255 = vunpack.c.l.b16 %v70
    %v256 = vunpack.c.h.b16 %v70
    %v257 = vunpack.c.l.b16 %v71
    %v258 = vunpack.c.h.b16 %v71
    %v259 = vunpack.c.l.b16 %v72
    %v260 = vunpack.c.h.b16 %v72
    %v261 = vunpack.c.l.b16 %v73
    %v262 = vunpack.c.h.b16 %v73
    %v263 = vunpack.c.l.b16 %v74
    %v264 = vunpack.c.h.b16 %v74
    %v265 = vunpack.c.l.b16 %v75
    %v266 = vunpack.c.h.b16 %v75
    %v267 = vunpack.c.l.b16 %v76
    %v268 = vunpack.c.h.b16 %v76
    %v269 = vunpack.c.l.b16 %v77
    %v270 = vunpack.c.h.b16 %v77
    %v271 = vunpack.c.l.b16 %v78
    %v272 = vunpack.c.h.b16 %v78
    %v273 = vunpack.c.l.b16 %v79
    %v274 = vunpack.c.h.b16 %v79
    %v275 = vunpack.c.l.b16 %v80
    %v276 = vunpack.c.h.b16 %v80
    %v277 = vunpack.c.l.b16 %v81
    %v278 = vunpack.c.h.b16 %v81
    %v279 = vunpack.c.l.b16 %v82
    %v280 = vunpack.c.h.b16 %v82
    %v281 = vunpack.c.l.b16 %v83
    %v282 = vunpack.c.h.b16 %v83
    %v283 = vunpack.c.l.b16 %v84
    %v284 = vunpack.c.h.b16 %v84
    %v285 = vunpack.c.l.b16 %v85
    %v286 = vunpack.c.h.b16 %v85
    %v287 = vunpack.c.l.b16 %v86
    %v288 = vunpack.c.h.b16 %v86
    %v289 = vunpack.c.l.b16 %v87
    %v290 = vunpack.c.h.b16 %v87
    %v291 = vunpack.c.l.b16 %v88
    %v292 = vunpack.c.h.b16 %v88
    %v293 = vunpack.c.l.b16 %v89
    %v294 = vunpack.c.h.b16 %v89
    %v295 = vunpack.c.l.b16 %v90
    %v296 = vunpack.c.h.b16 %v90
    %v297 = vpack.c.b16 %v171, %v169
    %v298 = vpack.c.b16 %v172, %v170
    %v299 = vpack.c.b16 %v175, %v173
    %v300 = vpack.c.b16 %v176, %v174
    %v301 = vpack.c.b16 %v179, %v177
    %v302 = vpack.c.b16 %v180, %v178
    %v303 = vpack.c.b16 %v183, %v181
    %v304 = vpack.c.b16 %v184, %v182
    %v305 = vpack.c.b16 %v187, %v185
    %v306 = vpack.c.b16 %v188, %v186
    %v307 = vpack.c.b16 %v191, %v189
    %v308 = vpack.c.b16 %v192, %v190
    %v309 = vpack.c.b16 %v195, %v193
    %v310 = vpack.c.b16 %v196, %v194
    %v311 = vpack.c.b16 %v199, %v197
    %v312 = vpack.c.b16 %v200, %v198
    %v313 = vpack.c.b16 %v203, %v201
    %v314 = vpack.c.b16 %v204, %v202
    %v315 = vpack.c.b16 %v207, %v205
    %v316 = vpack.c.b16 %v208, %v206
    %v317 = vpack.c.b16 %v211, %v209
    %v318 = vpack.c.b16 %v212, %v210
    %v319 = vpack.c.b16 %v215, %v213
    %v320 = vpack.c.b16 %v216, %v214
    %v321 = vpack.c.b16 %v219, %v217
    %v322 = vpack.c.b16 %v220, %v218
    %v323 = vpack.c.b16 %v223, %v221
    %v324 = vpack.c.b16 %v224, %v222
    %v325 = vpack.c.b16 %v227, %v225
    %v326 = vpack.c.b16 %v228, %v226
    %v327 = vpack.c.b16 %v231, %v229
    %v328 = vpack.c.b16 %v232, %v230
    %v329 = vpack.c.b16 %v235, %v233
    %v330 = vpack.c.b16 %v236, %v234
    %v331 = vpack.c.b16 %v239, %v237
    %v332 = vpack.c.b16 %v240, %v238
    %v333 = vpack.c.b16 %v243, %v241
    %v334 = vpack.c.b16 %v244, %v242
    %v335 = vpack.c.b16 %v247, %v245
    %v336 = vpack.c.b16 %v248, %v246
    %v337 = vpack.c.b16 %v251, %v249
    %v338 = vpack.c.b16 %v252, %v250
    %v339 = vpack.c.b16 %v255, %v253
    %v340 = vpack.c.b16 %v256, %v254
    %v341 = vpack.c.b16 %v259, %v257
    %v342 = vpack.c.b16 %v260, %v258
    %v343 = vpack.c.b16 %v263, %v261
    %v344 = vpack.c.b16 %v264, %v262
    %v345 = vpack.c.b16 %v267, %v265
    %v346 = vpack.c.b16 %v268, %v266
    %v347 = vpack.c.b16 %v271, %v269
    %v348 = vpack.c.b16 %v272, %v270
    %v349 = vpack.c.b16 %v275, %v273
    %v350 = vpack.c.b16 %v276, %v274
    %v351 = vpack.c.b16 %v279, %v277
    %v352 = vpack.c.b16 %v280, %v278
    %v353 = vpack.c.b16 %v283, %v281
    %v354 = vpack.c.b16 %v284, %v282
    %v355 = vpack.c.b16 %v287, %v285
    %v356 = vpack.c.b16 %v288, %v286
    %v357 = vpack.c.b16 %v291, %v289
    %v358 = vpack.c.b16 %v292, %v290
    %v359 = vpack.c.b16 %v295, %v293
    %v360 = vpack.c.b16 %v296, %v294
    %425 = vmatprep.subr.bf16.mxu0 %v298
    %426 = vmatpush1.bf16.msra.mxu0 %v297
    %427 = vmatprep.subr.bf16.mxu0 %v300
    %428 = vmatpush1.bf16.msra.mxu0 %v299
    %429 = vmatprep.subr.bf16.mxu0 %v302
    %430 = vmatpush1.bf16.msra.mxu0 %v301
    %431 = vmatprep.subr.bf16.mxu0 %v304
    %432 = vmatpush1.bf16.msra.mxu0 %v303
    %433 = vmatprep.subr.bf16.mxu0 %v306
    %434 = vmatpush1.bf16.msra.mxu0 %v305
    %435 = vmatprep.subr.bf16.mxu0 %v308
    %436 = vmatpush1.bf16.msra.mxu0 %v307
    %437 = vmatprep.subr.bf16.mxu0 %v310
    %438 = vmatpush1.bf16.msra.mxu0 %v309
    %439 = vmatprep.subr.bf16.mxu0 %v312
    %440 = vmatpush1.bf16.msra.mxu0 %v311
    %441 = vmatprep.subr.bf16.mxu0 %v314
    %442 = vmatpush1.bf16.msra.mxu0 %v313
    %443 = vmatprep.subr.bf16.mxu0 %v316
    %444 = vmatpush1.bf16.msra.mxu0 %v315
    %445 = vmatprep.subr.bf16.mxu0 %v318
    %446 = vmatpush1.bf16.msra.mxu0 %v317
    %447 = vmatprep.subr.bf16.mxu0 %v320
    %448 = vmatpush1.bf16.msra.mxu0 %v319
    %449 = vmatprep.subr.bf16.mxu0 %v322
    %450 = vmatpush1.bf16.msra.mxu0 %v321
    %451 = vmatprep.subr.bf16.mxu0 %v324
    %452 = vmatpush1.bf16.msra.mxu0 %v323
    %453 = vmatprep.subr.bf16.mxu0 %v326
    %454 = vmatpush1.bf16.msra.mxu0 %v325
    %455 = vmatprep.subr.bf16.mxu0 %v328
    %456 = vmatpush1.bf16.msra.mxu0 %v327
    %457 = vmatprep.mubr.bf16.mxu0 %v98
    %458 = vmatmul.mubr.bf16.gmra.mrb[0].mxu0 %v97
    %v459 = vpop.f32.mrb[0].mxu0
    %v460 = vadd.f32 0.0, %v459
    %v461 = vpop.f32.mrb[0].mxu0
    %v462 = vadd.f32 0.0, %v461
    %v463 = vpop.f32.mrb[0].mxu0
    %v464 = vpop.f32.mrb[0].mxu0
    %465 = vdwg.mxu0
    %466 = vmatprep.subr.bf16.mxu0 %v330
    %467 = vmatpush1.bf16.msra.mxu0 %v329
    %468 = vmatprep.subr.bf16.mxu0 %v332
    %469 = vmatpush1.bf16.msra.mxu0 %v331
    %470 = vmatprep.subr.bf16.mxu0 %v334
    %471 = vmatpush1.bf16.msra.mxu0 %v333
    %472 = vmatprep.subr.bf16.mxu0 %v336
    %473 = vmatpush1.bf16.msra.mxu0 %v335
    %474 = vmatprep.subr.bf16.mxu0 %v338
    %475 = vmatpush1.bf16.msra.mxu0 %v337
    %476 = vmatprep.subr.bf16.mxu0 %v340
    %477 = vmatpush1.bf16.msra.mxu0 %v339
    %478 = vmatprep.subr.bf16.mxu0 %v342
    %479 = vmatpush1.bf16.msra.mxu0 %v341
    %480 = vmatprep.subr.bf16.mxu0 %v344
    %481 = vmatpush1.bf16.msra.mxu0 %v343
    %482 = vmatprep.subr.bf16.mxu0 %v346
    %483 = vmatpush1.bf16.msra.mxu0 %v345
    %484 = vmatprep.subr.bf16.mxu0 %v348
    %485 = vmatpush1.bf16.msra.mxu0 %v347
    %486 = vmatprep.subr.bf16.mxu0 %v350
    %487 = vmatpush1.bf16.msra.mxu0 %v349
    %488 = vmatprep.subr.bf16.mxu0 %v352
    %489 = vmatpush1.bf16.msra.mxu0 %v351
    %490 = vmatprep.subr.bf16.mxu0 %v354
    %491 = vmatpush1.bf16.msra.mxu0 %v353
    %492 = vmatprep.subr.bf16.mxu0 %v356
    %493 = vmatpush1.bf16.msra.mxu0 %v355
    %494 = vmatprep.subr.bf16.mxu0 %v358
    %495 = vmatpush1.bf16.msra.mxu0 %v357
    %496 = vmatprep.subr.bf16.mxu0 %v360
    %497 = vmatpush1.bf16.msra.mxu0 %v359
    %498 = vmatprep.mubr.bf16.mxu0 %v100
    %499 = vmatmul.mubr.bf16.gmra.mrb[0].mxu0 %v99
    %v500 = vpop.f32.mrb[0].mxu0
    %v501 = vadd.f32 %v460, %v500
    %v502 = vpop.f32.mrb[0].mxu0
    %v503 = vadd.f32 %v462, %v502
    %v504 = vpop.f32.mrb[0].mxu0
    %v505 = vpop.f32.mrb[0].mxu0
    %506 = vdwg.mxu0
    %v507 = vadd.f32 %v23, %v501
    %v508 = vadd.f32 %v24, %v503
    %509 = vst [vmem:[#allocation2] sm:$0xff] %v507
    %510 = vst [vmem:[#allocation2 + $0x8] sm:$0xff] %v508
    %v511 = vld [vmem:[%s2] ss:$2 sm:$0xf]
    %s512 = scalar_lea.vmem %s2, 1
    %v513 = vld [vmem:[%s512] ss:$2 sm:$0xf]
    %v514 = vld [vmem:[#allocation3] sm:$0x1]
    %v516 = vlaneseq
    %v517 = vshrl.u32 %v516, 7
    %v518 = vsub.s32 0, %v517
    %v519 = vrot.slane %v511, %v518
    %v520 = vlaneseq
    %v521 = vshrl.u32 %v520, 7
    %v522 = vsub.s32 1, %v521
    %v523 = vrot.slane %v511, %v522
    %v524 = vlaneseq
    %v525 = vshrl.u32 %v524, 7
    %v526 = vsub.s32 2, %v525
    %v527 = vrot.slane %v511, %v526
    %v528 = vlaneseq
    %v529 = vshrl.u32 %v528, 7
    %v530 = vsub.s32 3, %v529
    %v531 = vrot.slane %v511, %v530
    %vm536 = vcmask 1040384
    %v537 = vsel %vm536, %v519, 0.0
    %v538 = vsel %vm536, %v523, 0.0
    %v539 = vadd.f32 %v537, %v538
    %v540 = vsel %vm536, %v527, 0.0
    %v541 = vadd.f32 %v539, %v540
    %v542 = vsel %vm536, %v531, 0.0
    %v543 = vadd.f32 %v541, %v542
    %544 = vadd.xlane.f32.xlu0 %v543
    %v545 = vpop.xlane.xlu0 %544
    %v546 = vadd.f32 %v514, %v545
    %vm547 = vcmask 0
    %548 = vst.msk [vmem:[#allocation3] sm:$0x1] %vm547, %v546
    %v549 = vld [vmem:[#allocation3 + $0x1] sm:$0x1]
    %v551 = vlaneseq
    %v552 = vshrl.u32 %v551, 7
    %v553 = vsub.s32 0, %v552
    %v554 = vrot.slane %v513, %v553
    %v555 = vlaneseq
    %v556 = vshrl.u32 %v555, 7
    %v557 = vsub.s32 1, %v556
    %v558 = vrot.slane %v513, %v557
    %v559 = vlaneseq
    %v560 = vshrl.u32 %v559, 7
    %v561 = vsub.s32 2, %v560
    %v562 = vrot.slane %v513, %v561
    %v563 = vlaneseq
    %v564 = vshrl.u32 %v563, 7
    %v565 = vsub.s32 3, %v564
    %v566 = vrot.slane %v513, %v565
    %v571 = vsel %vm536, %v554, 0.0
    %v572 = vsel %vm536, %v558, 0.0
    %v573 = vadd.f32 %v571, %v572
    %v574 = vsel %vm536, %v562, 0.0
    %v575 = vadd.f32 %v573, %v574
    %v576 = vsel %vm536, %v566, 0.0
    %v577 = vadd.f32 %v575, %v576
    %578 = vadd.xlane.f32.xlu0 %v577
    %v579 = vpop.xlane.xlu0 %578
    %v580 = vadd.f32 %v549, %v579
    %581 = vst.msk [vmem:[#allocation3 + $0x1] sm:$0x1] %vm547, %v580
    %v582 = vld [vmem:[#allocation3 + $0x2] sm:$0x1]
    %v583 = vmul.f32 %v511, %v513
    %v585 = vlaneseq
    %v586 = vshrl.u32 %v585, 7
    %v587 = vsub.s32 0, %v586
    %v588 = vrot.slane %v583, %v587
    %v589 = vlaneseq
    %v590 = vshrl.u32 %v589, 7
    %v591 = vsub.s32 1, %v590
    %v592 = vrot.slane %v583, %v591
    %v593 = vlaneseq
    %v594 = vshrl.u32 %v593, 7
    %v595 = vsub.s32 2, %v594
    %v596 = vrot.slane %v583, %v595
    %v597 = vlaneseq
    %v598 = vshrl.u32 %v597, 7
    %v599 = vsub.s32 3, %v598
    %v600 = vrot.slane %v583, %v599
    %v605 = vsel %vm536, %v588, 0.0
    %v606 = vsel %vm536, %v592, 0.0
    %v607 = vadd.f32 %v605, %v606
    %v608 = vsel %vm536, %v596, 0.0
    %v609 = vadd.f32 %v607, %v608
    %v610 = vsel %vm536, %v600, 0.0
    %v611 = vadd.f32 %v609, %v610
    %612 = vadd.xlane.f32.xlu0 %v611
    %v613 = vpop.xlane.xlu0 %612
    %v614 = vadd.f32 %v582, %v613
    %615 = vst.msk [vmem:[#allocation3 + $0x2] sm:$0x1] %vm547, %v614
    %v616 = vld [vmem:[#allocation3 + $0x3] sm:$0x1]
    %v617 = vmul.f32 %v511, %v511
    %v619 = vlaneseq
    %v620 = vshrl.u32 %v619, 7
    %v621 = vsub.s32 0, %v620
    %v622 = vrot.slane %v617, %v621
    %v623 = vlaneseq
    %v624 = vshrl.u32 %v623, 7
    %v625 = vsub.s32 1, %v624
    %v626 = vrot.slane %v617, %v625
    %v627 = vlaneseq
    %v628 = vshrl.u32 %v627, 7
    %v629 = vsub.s32 2, %v628
    %v630 = vrot.slane %v617, %v629
    %v631 = vlaneseq
    %v632 = vshrl.u32 %v631, 7
    %v633 = vsub.s32 3, %v632
    %v634 = vrot.slane %v617, %v633
    %v639 = vsel %vm536, %v622, 0.0
    %v640 = vsel %vm536, %v626, 0.0
    %v641 = vadd.f32 %v639, %v640
    %v642 = vsel %vm536, %v630, 0.0
    %v643 = vadd.f32 %v641, %v642
    %v644 = vsel %vm536, %v634, 0.0
    %v645 = vadd.f32 %v643, %v644
    %646 = vadd.xlane.f32.xlu0 %v645
    %v647 = vpop.xlane.xlu0 %646
    %v648 = vadd.f32 %v616, %v647
    %649 = vst.msk [vmem:[#allocation3 + $0x3] sm:$0x1] %vm547, %v648
    %v650 = vld [vmem:[#allocation3 + $0x4] sm:$0x1]
    %v651 = vmul.f32 %v513, %v513
    %v653 = vlaneseq
    %v654 = vshrl.u32 %v653, 7
    %v655 = vsub.s32 0, %v654
    %v656 = vrot.slane %v651, %v655
    %v657 = vlaneseq
    %v658 = vshrl.u32 %v657, 7
    %v659 = vsub.s32 1, %v658
    %v660 = vrot.slane %v651, %v659
    %v661 = vlaneseq
    %v662 = vshrl.u32 %v661, 7
    %v663 = vsub.s32 2, %v662
    %v664 = vrot.slane %v651, %v663
    %v665 = vlaneseq
    %v666 = vshrl.u32 %v665, 7
    %v667 = vsub.s32 3, %v666
    %v668 = vrot.slane %v651, %v667
    %v673 = vsel %vm536, %v656, 0.0
    %v674 = vsel %vm536, %v660, 0.0
    %v675 = vadd.f32 %v673, %v674
    %v676 = vsel %vm536, %v664, 0.0
    %v677 = vadd.f32 %v675, %v676
    %v678 = vsel %vm536, %v668, 0.0
    %v679 = vadd.f32 %v677, %v678
    %680 = vadd.xlane.f32.xlu0 %v679
    %v681 = vpop.xlane.xlu0 %680
    %v682 = vadd.f32 %v650, %v681
    %683 = vst.msk [vmem:[#allocation3 + $0x4] sm:$0x1] %vm547, %v682
    // Predicated region
    $region18: #{_lambda_.1} parent=1 // pred_check
      %p684 = pneg %p15
    $region19: #{_lambda_.1} parent=1 // pred_check_branch
      %686 = sbr.rel (%p684) target = $region21
    $region20: #{_lambda_.1} parent=1 // pred_region
      %v687 = vld [vmem:[#allocation2] sm:$0xff]
      %v688 = vld [vmem:[#allocation2 + $0x8] sm:$0xff]
      %v689 = vmul.f32 %v687, %v687
      %v690 = vmul.f32 %v688, %v688
      %v691 = vadd.f32 %v689, %v690
      %v692 = vlaneseq
      %v693 = vand.u32 %v692, 127
      %v694 = vcvt.s32.f32 %v693
      %vm695 = vcmp.lt.f32.partialorder %v694, 105.0
      %v696 = vsel %vm695, %v691, -1.0
      %vm697 = vcmask 1042434
      %v698 = vsel %vm697, %v696, -inf
      %699 = vmax.xlane.f32.xlu0 %v698
      %v700 = vpop.xlane.xlu0 %699
      %vm701 = vcmp.eq.f32.partialorder %v696, %v700
      %v702 = vsel %vm701, %v694, 128.0
      %v703 = vsel %vm697, %v702, inf
      %704 = vmin.xlane.f32.xlu0 %v703
      %v705 = vpop.xlane.xlu0 %704
      %vm706 = vcmask 1041409
      %v707 = vsel %vm706, %v696, -inf
      %708 = vmax.xlane.f32.xlu0 %v707
      %v709 = vpop.xlane.xlu0 %708
      %vm710 = vcmp.eq.f32.partialorder %v696, %v709
      %v711 = vsel %vm710, %v694, 128.0
      %v712 = vsel %vm706, %v711, inf
      %713 = vmin.xlane.f32.xlu0 %v712
      %v714 = vpop.xlane.xlu0 %713
      %v715 = vsel %vm536, %v691, 0.0
      %716 = vadd.xlane.f32.xlu0 %v715
      %v717 = vpop.xlane.xlu0 %716
      %v718 = vadd.f32 %v717, 1e-12
      %v719 = vrcp.pop %v718
      %v720 = vmul.f32 %v691, %v719
      %v721 = vsel %vm695, %v720, -1e+30
      %v722 = vsel %vm536, %v721, -inf
      %723 = vmax.xlane.f32.xlu0 %v722
      %v724 = vpop.xlane.xlu0 %723
      %v725 = vsub.f32 %v721, %v724
      %v726 = vmul.f32 %v725, 1.442695
      %v727 = vpow.pop %v726
      %v728 = vsel %vm536, %v727, 0.0
      %729 = vadd.xlane.f32.xlu0 %v728
      %v730 = vpop.xlane.xlu0 %729
      %v731 = vlog2.pop %v730
      %v732 = vmul.f32 %v731, 0.6931472
      %v733 = vadd.f32 %v724, %v732
      %vm734 = vcmp.eq.f32.partialorder %v694, %v705
      %v736 = vrot.slane %v720, 6
      %v738 = vsel %vm734, %v736, 0.0
      %v739 = vsel %vm697, %v738, 0.0
      %740 = vadd.xlane.f32.xlu0 %v739
      %v741 = vpop.xlane.xlu0 %740
      %v743 = vrot.slane %v741, 2
      %v745 = vsub.f32 %v733, %v743
      %v746 = vsub.f32 %v694, %v705
      %v747 = vsub.f32 0.0, %v746
      %v748 = vmul.f32 %v747, %v746
      %v749 = vmul.f32 %v748, 0.055555556
      %v750 = vmul.f32 %v749, 1.442695
      %v751 = vpow.pop %v750
      %v752 = vmul.f32 %v751, 0.13298076
      %v753 = vmax.f32 %v752, 1e-15
      %v754 = vsub.f32 %v694, %v714
      %v755 = vsub.f32 0.0, %v754
      %v756 = vmul.f32 %v755, %v754
      %v757 = vmul.f32 %v756, 0.055555556
      %v758 = vmul.f32 %v757, 1.442695
      %v759 = vpow.pop %v758
      %v760 = vmul.f32 %v759, 0.13298076
      %v761 = vmax.f32 %v760, 1e-15
      %v762 = vlog2.pop %v753
      %v763 = vmul.f32 %v762, 0.6931472
      %v764 = vlog2.pop %v761
      %v765 = vmul.f32 %v764, 0.6931472
      %v767 = vrot.slane %v765, 7
      %v769 = vsub.f32 %v763, %v767
      %v770 = vmul.f32 %v753, %v769
      %v771 = vsel %vm695, %v770, 0.0
      %v772 = vsel %vm697, %v771, 0.0
      %773 = vadd.xlane.f32.xlu0 %v772
      %v774 = vpop.xlane.xlu0 %773
      %v775 = vld [vmem:[#allocation3] sm:$0x1]
      %v776 = vld [vmem:[#allocation3 + $0x1] sm:$0x1]
      %v777 = vld [vmem:[#allocation3 + $0x2] sm:$0x1]
      %v778 = vld [vmem:[#allocation3 + $0x3] sm:$0x1]
      %v779 = vld [vmem:[#allocation3 + $0x4] sm:$0x1]
      %v780 = vmul.f32 %v777, 256.0
      %v781 = vmul.f32 %v775, %v776
      %v782 = vsub.f32 %v780, %v781
      %v783 = vmul.f32 %v778, 256.0
      %v784 = vmul.f32 %v775, %v775
      %v785 = vsub.f32 %v783, %v784
      %v786 = vmul.f32 %v779, 256.0
      %v787 = vmul.f32 %v776, %v776
      %v788 = vsub.f32 %v786, %v787
      %v789 = vmul.f32 %v785, %v788
      %v790 = vrsqrt.pop %v789
      %v791 = vmul.f32 %v789, %v790
      %vm792 = vcmp.eq.f32.partialorder %v789, inf
      %v793 = vsel %vm792, %v789, %v791
      %vm794 = vcmp.eq.f32.partialorder %v789, 0.0
      %v795 = vand.u32 %v789, 2147483648
      %v796 = vsel %vm794, %v795, %v793
      %v797 = vrcp.pop %v796
      %v798 = vmul.f32 %v782, %v797
      %v799 = vsub.f32 1.0, %v798
      %vm800 = vcmp.ne.f32.partialorder %v799, %v799
      %v801 = vsel %vm800, 0.0, %v799
      %v802 = vmul.f32 %v801, 0.2
      %v803 = vadd.f32 %v802, %v745
      %v805 = vrot.slane %v774, 2
      %v807 = vadd.f32 %v803, %v805
      %808 = vst.msk [vmem:[#allocation4] sm:$0x1] %vm547, %v807
    $region21: #{_lambda_.1} parent=1 // pred_fallthru
      _
    // Predicated region
    $region22: #{_lambda_.1} parent=1 // pred_check
      _
    $region23: #{_lambda_.1} parent=1 // pred_check_branch
      %810 = sbr.rel (0) target = $region25
    $region24: #{_lambda_.1} parent=1 // pred_region
      %s812 = ssub.s32 16, 16
      %813 = vsyncadd [#allocation5], %s812
      %s815 = sshll.u32 [#allocation4], 4
      %s816 = int_to_ptr.vmem [resolvable:$true] %s815
      %818 = dma.vmem_to_hbm [thread:$0]  %s816, 16, %s3, [#allocation5]
    $region25: #{_lambda_.1} parent=1 // pred_fallthru
      _
    // Predicated region
    $region26: #{_lambda_.1} parent=1 // pred_check
      _
    $region27: #{_lambda_.1} parent=1 // pred_check_branch
      %820 = sbr.rel (0) target = $region29
    $region28: #{_lambda_.1} parent=1 // pred_region
      %821 = dma.done [#allocation5], 16
    $region29: #{_lambda_.1} parent=1 // pred_fallthru
      _
    %822 = vsyncpa [#allocation5], 1

</llo_original>
